<compile_context>
chip_gen: v7x
topology: tpu7x:2x2x1
jax: 0.10.0
libtpu: 0.0.40
codegen_flags: <defaults>
</compile_context>

<pallas_src>
import math
import jax
import jax.numpy as jnp
from jax import lax
from jax.experimental import pallas as pl
from jax.experimental.pallas import tpu as pltpu


def _gelu_exact(x):
    # nn.GELU() default is the exact (erf) variant.
    return 0.5 * x * (1.0 + lax.erf(x * (1.0 / math.sqrt(2.0))))


def projection_head_kernel(x_ref, w1_ref, w2_ref, vecs_ref, out_ref):
    w1 = w1_ref[...]                                  # [E, P], MXU dtype
    w2 = w2_ref[...]                                  # [P, P], MXU dtype
    x = x_ref[...].astype(w1.dtype)                   # feed MXU in weight dtype
    vecs = vecs_ref[...].astype(jnp.float32)          # [4, P]: b1, b2, gamma, beta
    b1, b2, gamma, beta = vecs[0:1], vecs[1:2], vecs[2:3], vecs[3:4]

    # Linear 1 (projection) — MXU with f32 accumulation.
    projected = jnp.dot(x, w1, preferred_element_type=jnp.float32) + b1

    # GELU (exact erf) in f32.
    h = _gelu_exact(projected)

    # Linear 2 (fc) — cast back to the weight dtype for the MXU (explicit
    # bf16 truncation of the GELU output when mxu_dtype=bf16 is requested).
    y = jnp.dot(h.astype(w2.dtype), w2, preferred_element_type=jnp.float32)

    # Dropout: identity in eval / inference mode.
    # TODO(synk): training-mode dropout would need pltpu.prng_* masking.

    # Residual with b2 folded in: z = (h @ W2 + b2) + projected.
    z = y + (projected + b2)

    # LayerNorm over the last dim, eps=1e-5, two-pass statistics (robust).
    mu = jnp.mean(z, axis=-1, keepdims=True)
    d = z - mu
    var = jnp.mean(d * d, axis=-1, keepdims=True)
    inv = lax.rsqrt(var + 1e-5)
    out_ref[...] = (d * inv * gamma + beta).astype(out_ref.dtype)


def _pick_block_b(B, E, P, x_itemsize, w_itemsize, *, max_block=512, row_multiple=8):
    """Largest row-multiple divisor of B, <= max_block.

    Only prefers a grid >= 2 split (so both v7x TensorCores get work) when the
    per-core x/out traffic saved outweighs duplicating the resident-weight DMA.
    """
    cands = [b for b in range(row_multiple, min(max_block, B) + 1, row_multiple)
             if B % b == 0]
    if not cands:
        return B                      # tiny / odd batch: one full-size block
    x_bytes = B * E * x_itemsize
    w_bytes = (E * P + P * P) * w_itemsize
    if x_bytes >= 2 * w_bytes:        # worth splitting across cores
        geq2 = [b for b in cands if B // b >= 2]
        if geq2:
            return max(geq2)
    return max(cands)


def projection_head(x, w1, b1, w2, b2, gamma, beta, *, block_b=None, mxu_dtype=None):
    B, E = x.shape
    P = w1.shape[1]

    # Optional reduced-precision MXU path (weights pre-cast once, outside the grid).
    if mxu_dtype is not None:
        w1 = w1.astype(mxu_dtype)
        w2 = w2.astype(mxu_dtype)

    x_itemsize = jnp.dtype(x.dtype).itemsize
    w_itemsize = jnp.dtype(w1.dtype).itemsize
    out_itemsize = x_itemsize
    row_multiple = 16 if w_itemsize == 2 else (32 if w_itemsize == 1 else 8)

    if block_b is None:
        block_b = _pick_block_b(B, E, P, x_itemsize, w_itemsize,
                                row_multiple=row_multiple)
    assert B % block_b == 0
    grid = (B // block_b,)

    # Pack the four P-sized vectors into one resident f32 operand: [4, P].
    vecs = jnp.stack([b1, b2, gamma, beta], axis=0).astype(jnp.float32)

    # VMEM budget from actual block sizes: double-buffered x/out tiles,
    # single-buffered resident weights, ~2x headroom (vecs rounded to 8 rows).
    vmem_need = (2 * block_b * E * x_itemsize
                 + 2 * block_b * P * out_itemsize
                 + E * P * w_itemsize
                 + P * P * w_itemsize
                 + 8 * P * 4)
    vmem_limit = int(max(4 * 1024 * 1024, min(2 * vmem_need, 128 * 1024 * 1024)))

    cost = pl.CostEstimate(
        flops=2 * B * E * P + 2 * B * P * P,
        transcendentals=B * P,   # advisory only; erf lowers to a VPU polynomial
        bytes_accessed=(B * E * x_itemsize
                        + (E * P + P * P) * w_itemsize
                        + 4 * P * 4
                        + B * P * out_itemsize),
    )

    return pl.pallas_call(
        projection_head_kernel,
        out_shape=jax.ShapeDtypeStruct((B, P), x.dtype),
        grid_spec=pltpu.PrefetchScalarGridSpec(
            num_scalar_prefetch=0,
            grid=grid,
            in_specs=[
                pl.BlockSpec((block_b, E), lambda i: (i, 0)),            # x tile
                pl.BlockSpec((E, P), lambda i: (0, 0),
                             pipeline_mode=pl.Buffered(1)),              # W1 resident
                pl.BlockSpec((P, P), lambda i: (0, 0),
                             pipeline_mode=pl.Buffered(1)),              # W2 resident
                pl.BlockSpec((4, P), lambda i: (0, 0),
                             pipeline_mode=pl.Buffered(1)),              # b1|b2|gamma|beta
            ],
            out_specs=pl.BlockSpec((block_b, P), lambda i: (i, 0)),
        ),
        compiler_params=pltpu.CompilerParams(
            dimension_semantics=("parallel",),
            vmem_limit_bytes=vmem_limit,
        ),
        cost_estimate=cost,
    )(x, w1, w2, vecs)


def reference(x, w1, b1, w2, b2, gamma, beta):
    projected = x @ w1 + b1
    h = jax.nn.gelu(projected, approximate=False)
    y = h @ w2 + b2
    z = y + projected
    mu = jnp.mean(z, axis=-1, keepdims=True)
    var = jnp.mean((z - mu) ** 2, axis=-1, keepdims=True)
    return (z - mu) / jnp.sqrt(var + 1e-5) * gamma + beta


if __name__ == "__main__":
    # ProjectionHead shapes: E = CFG.text_embedding (768) -> P = CFG.projection_dim (256).
    # Small batch; the wrapper picks the block/grid automatically.
    B, E, P = 64, 768, 256

    key = jax.random.PRNGKey(0)
    kx, kw1, kb1, kw2, kb2 = jax.random.split(key, 5)

    x = jax.random.normal(kx, (B, E), dtype=jnp.float32)

    # Deterministic, PyTorch-Linear-like init (uniform +/- 1/sqrt(fan_in)).
    w1 = jax.random.uniform(kw1, (E, P), jnp.float32,
                            -1.0 / math.sqrt(E), 1.0 / math.sqrt(E))
    b1 = jax.random.uniform(kb1, (P,), jnp.float32,
                            -1.0 / math.sqrt(E), 1.0 / math.sqrt(E))
    w2 = jax.random.uniform(kw2, (P, P), jnp.float32,
                            -1.0 / math.sqrt(P), 1.0 / math.sqrt(P))
    b2 = jax.random.uniform(kb2, (P,), jnp.float32,
                            -1.0 / math.sqrt(P), 1.0 / math.sqrt(P))
    gamma = jnp.ones((P,), jnp.float32)    # LayerNorm weight init
    beta = jnp.zeros((P,), jnp.float32)    # LayerNorm bias init

    ref = reference(x, w1, b1, w2, b2, gamma, beta)

    # Precision-critical path: f32 MXU, tight tolerance.
    out_f32 = jax.block_until_ready(projection_head(x, w1, b1, w2, b2, gamma, beta))
    assert out_f32.shape == (B, P)
    err32 = jnp.max(jnp.abs(out_f32 - ref))
    assert jnp.allclose(out_f32, ref, atol=2e-4, rtol=2e-4), f"f32 max abs err {err32}"

    # Fast path: bf16-fed MXU with f32 accumulation, looser tolerance.
    out_bf16 = jax.block_until_ready(
        projection_head(x, w1, b1, w2, b2, gamma, beta, mxu_dtype=jnp.bfloat16))
    errbf = jnp.max(jnp.abs(out_bf16 - ref))
    assert jnp.allclose(out_bf16, ref, atol=1e-1, rtol=1e-1), f"bf16 max abs err {errbf}"

    print("KERNEL_OK")
</pallas_src>

<mosaic_0001>
module attributes {stable_mosaic.version = 11 : i64} {
  func.func @projection_head_kernel(%arg0: i32, %arg1: memref<64x768xf32, #tpu.memory_space<vmem>>, %arg2: memref<768x256xf32, #tpu.memory_space<vmem>>, %arg3: memref<256x256xf32, #tpu.memory_space<vmem>>, %arg4: memref<4x256xf32, #tpu.memory_space<vmem>>, %arg5: memref<64x256xf32, #tpu.memory_space<vmem>>) attributes {dimension_semantics = [#tpu.dimension_semantics<parallel>], iteration_bounds = array<i64: 1>, scalar_prefetch = 0 : i64, scratch_operands = 0 : i64, tpu.core_type = #tpu.core_type<tc>, window_params = [{transform_indices = @transform_0, window_bounds = array<i64: 64, 768>}, {pipeline_mode = #tpu.pipeline_mode<synchronous>, transform_indices = @transform_1, window_bounds = array<i64: 768, 256>}, {pipeline_mode = #tpu.pipeline_mode<synchronous>, transform_indices = @transform_2, window_bounds = array<i64: 256, 256>}, {pipeline_mode = #tpu.pipeline_mode<synchronous>, transform_indices = @transform_3, window_bounds = array<i64: 4, 256>}, {transform_indices = @transform_4, window_bounds = array<i64: 64, 256>}]} {
    %c0 = arith.constant 0 : index
    %c0_0 = arith.constant 0 : index
    %0 = vector.load %arg2[%c0, %c0_0] : memref<768x256xf32, #tpu.memory_space<vmem>>, vector<768x256xf32>
    %c0_1 = arith.constant 0 : index
    %c0_2 = arith.constant 0 : index
    %1 = vector.load %arg3[%c0_1, %c0_2] : memref<256x256xf32, #tpu.memory_space<vmem>>, vector<256x256xf32>
    %c0_3 = arith.constant 0 : index
    %c0_4 = arith.constant 0 : index
    %2 = vector.load %arg1[%c0_3, %c0_4] : memref<64x768xf32, #tpu.memory_space<vmem>>, vector<64x768xf32>
    %c0_5 = arith.constant 0 : index
    %c0_6 = arith.constant 0 : index
    %3 = vector.load %arg4[%c0_5, %c0_6] : memref<4x256xf32, #tpu.memory_space<vmem>>, vector<4x256xf32>
    %4 = vector.extract_strided_slice %3 {offsets = [0, 0], sizes = [1, 256], strides = [1, 1]} : vector<4x256xf32> to vector<1x256xf32>
    %5 = vector.extract_strided_slice %3 {offsets = [1, 0], sizes = [1, 256], strides = [1, 1]} : vector<4x256xf32> to vector<1x256xf32>
    %6 = vector.extract_strided_slice %3 {offsets = [2, 0], sizes = [1, 256], strides = [1, 1]} : vector<4x256xf32> to vector<1x256xf32>
    %7 = vector.extract_strided_slice %3 {offsets = [3, 0], sizes = [1, 256], strides = [1, 1]} : vector<4x256xf32> to vector<1x256xf32>
    %cst = arith.constant dense<0.000000e+00> : vector<64x256xf32>
    %8 = tpu.matmul %2, %0, %cst {dimension_numbers = #tpu.dot_dimension_numbers<[1], [0], [0], [1], [0, 0, 1, 1], [], []>} : vector<64x768xf32>, vector<768x256xf32>, vector<64x256xf32> -> vector<64x256xf32>
    %9 = vector.broadcast %4 : vector<1x256xf32> to vector<64x256xf32>
    %10 = arith.addf %8, %9 : vector<64x256xf32>
    %cst_7 = arith.constant 5.000000e-01 : f32
    %11 = vector.broadcast %cst_7 : f32 to vector<64x256xf32>
    %12 = arith.mulf %11, %10 : vector<64x256xf32>
    %cst_8 = arith.constant 0.707106769 : f32
    %13 = vector.broadcast %cst_8 : f32 to vector<64x256xf32>
    %14 = arith.mulf %10, %13 : vector<64x256xf32>
    %15 = math.erf %14 : vector<64x256xf32>
    %cst_9 = arith.constant 1.000000e+00 : f32
    %16 = vector.broadcast %cst_9 : f32 to vector<64x256xf32>
    %17 = arith.addf %16, %15 : vector<64x256xf32>
    %18 = arith.mulf %12, %17 : vector<64x256xf32>
    %cst_10 = arith.constant dense<0.000000e+00> : vector<64x256xf32>
    %19 = tpu.matmul %18, %1, %cst_10 {dimension_numbers = #tpu.dot_dimension_numbers<[1], [0], [0], [1], [0, 0, 1, 1], [], []>} : vector<64x256xf32>, vector<256x256xf32>, vector<64x256xf32> -> vector<64x256xf32>
    %20 = vector.broadcast %5 : vector<1x256xf32> to vector<64x256xf32>
    %21 = arith.addf %10, %20 : vector<64x256xf32>
    %22 = arith.addf %19, %21 : vector<64x256xf32>
    %cst_11 = arith.constant dense<0.000000e+00> : vector<64xf32>
    %23 = vector.multi_reduction <add>, %22, %cst_11 [1] : vector<64x256xf32> to vector<64xf32>
    %24 = vector.shape_cast %23 : vector<64xf32> to vector<64x1xf32>
    %cst_12 = arith.constant 2.560000e+02 : f32
    %25 = vector.broadcast %cst_12 : f32 to vector<64x1xf32>
    %26 = arith.divf %24, %25 : vector<64x1xf32>
    %27 = vector.broadcast %26 : vector<64x1xf32> to vector<64x256xf32>
    %28 = arith.subf %22, %27 : vector<64x256xf32>
    %29 = arith.mulf %28, %28 : vector<64x256xf32>
    %cst_13 = arith.constant dense<0.000000e+00> : vector<64xf32>
    %30 = vector.multi_reduction <add>, %29, %cst_13 [1] : vector<64x256xf32> to vector<64xf32>
    %31 = vector.shape_cast %30 : vector<64xf32> to vector<64x1xf32>
    %cst_14 = arith.constant 2.560000e+02 : f32
    %32 = vector.broadcast %cst_14 : f32 to vector<64x1xf32>
    %33 = arith.divf %31, %32 : vector<64x1xf32>
    %cst_15 = arith.constant 9.99999974E-6 : f32
    %34 = vector.broadcast %cst_15 : f32 to vector<64x1xf32>
    %35 = arith.addf %33, %34 : vector<64x1xf32>
    %36 = math.rsqrt %35 : vector<64x1xf32>
    %37 = vector.broadcast %36 : vector<64x1xf32> to vector<64x256xf32>
    %38 = arith.mulf %28, %37 : vector<64x256xf32>
    %39 = vector.broadcast %6 : vector<1x256xf32> to vector<64x256xf32>
    %40 = arith.mulf %38, %39 : vector<64x256xf32>
    %41 = vector.broadcast %7 : vector<1x256xf32> to vector<64x256xf32>
    %42 = arith.addf %40, %41 : vector<64x256xf32>
    %c0_16 = arith.constant 0 : index
    %c0_17 = arith.constant 0 : index
    %43 = vector.load %arg5[%c0_16, %c0_17] : memref<64x256xf32, #tpu.memory_space<vmem>>, vector<64x256xf32>
    tpu.vector_store %arg5[%c0_16, %c0_17], %42 {strides = array<i32>} : memref<64x256xf32, #tpu.memory_space<vmem>>, vector<64x256xf32>,
    return
  }
  func.func @transform_0(%arg0: i32) -> (i32, i32) {
    %c0_i32 = arith.constant 0 : i32
    %c0_i32_0 = arith.constant 0 : i32
    return %arg0, %c0_i32 : i32, i32
  }
  func.func @transform_1(%arg0: i32) -> (i32, i32) {
    %c0_i32 = arith.constant 0 : i32
    %c0_i32_0 = arith.constant 0 : i32
    %c0_i32_1 = arith.constant 0 : i32
    return %c0_i32, %c0_i32_0 : i32, i32
  }
  func.func @transform_2(%arg0: i32) -> (i32, i32) {
    %c0_i32 = arith.constant 0 : i32
    %c0_i32_0 = arith.constant 0 : i32
    %c0_i32_1 = arith.constant 0 : i32
    return %c0_i32, %c0_i32_0 : i32, i32
  }
  func.func @transform_3(%arg0: i32) -> (i32, i32) {
    %c0_i32 = arith.constant 0 : i32
    %c0_i32_0 = arith.constant 0 : i32
    %c0_i32_1 = arith.constant 0 : i32
    return %c0_i32, %c0_i32_0 : i32, i32
  }
  func.func @transform_4(%arg0: i32) -> (i32, i32) {
    %c0_i32 = arith.constant 0 : i32
    %c0_i32_0 = arith.constant 0 : i32
    return %arg0, %c0_i32 : i32, i32
  }
}

</mosaic_0001>

<llo_original>
// kernel: tpu_custom_call.1
$region0: #{tpu_custom_call.1}
  #allocation0 [shape = 'u32[]', space=smem, size = 0x4, offset = 0x4, fixed_abs, tag = 'smem constant byte address 0x4 - core index']
  #allocation1 [shape = 'u32[144,128]{1,0:T(1,128)}', space=vmem, size = 0x12000, scoped, tag = 'internal scratch']
  %s0 = inlined_call_operand.hbm [shape: f32[64,768], index: 0, kind: input, shape index: {}]
  %s1 = inlined_call_operand.hbm [shape: f32[768,256], index: 1, kind: input, shape index: {}]
  %s2 = inlined_call_operand.hbm [shape: f32[256,256], index: 2, kind: input, shape index: {}]
  %s3 = inlined_call_operand.vmem [shape: f32[4,256], index: 3, kind: input, shape index: {}]
  %s4 = inlined_call_operand.hbm [shape: f32[64,256], index: 4, kind: output, shape index: {}]
  %s5 = sld [smem:[#allocation0]]
  $region38: #{tpu_custom_call.1} parent=0
    _
  %s7 = ssub.s32 1, %s5
  %s8 = scalar_select 0, %s7, %s5
  $region1: #{tpu_custom_call.1} parent=0
    #allocation2 [shape = 'u8[196608]{0}', space=vmem, size = 0x30000, scoped, tag = 'input window, operand 0, single buffered']
    #allocation3 [shape = 's32[1]{0}', space=sflag, size = 0x4, scoped, tag = 'scoped memory for tpu_custom_call.1']
    #allocation4 [shape = 's32[1]{0}', space=sflag, size = 0x4, scoped, tag = 'scoped memory for tpu_custom_call.1']
    #allocation5 [shape = 'u8[786432]{0}', space=vmem, size = 0xc0000, scoped, tag = 'input window, operand 1, single buffered']
    #allocation6 [shape = 's32[1]{0}', space=sflag, size = 0x4, scoped, tag = 'scoped memory for tpu_custom_call.1']
    #allocation7 [shape = 'u8[262144]{0}', space=vmem, size = 0x40000, scoped, tag = 'input window, operand 2, single buffered']
    #allocation8 [shape = 'u8[65536]{0}', space=vmem, size = 0x10000, scoped, tag = 'output window, operand 0, single buffered']
    %9 = vsyncpa [#allocation3], 0
    %10 = vsyncpa [#allocation6], 0
    %11 = vsyncpa [#allocation4], 0
    // Predicated region
    $region2: #{tpu_custom_call.1} parent=1 // pred_check
      _
    $region3: #{tpu_custom_call.1} parent=1 // pred_check_branch
      %13 = sbr.rel (0) target = $region5
    $region4: #{tpu_custom_call.1} parent=1 // pred_region
      %s15 = ssub.s32 6144, 6144
      %16 = vsyncadd [#allocation3], %s15
      %s17 = sshll.u32 [#allocation2], 4
      %s18 = int_to_ptr.vmem [resolvable:$true] %s17
      %23 = dma.hbm_to_vmem [thread:$0]  %s0, 6144, %s18, [#allocation3], 768, 768, 48
    $region5: #{tpu_custom_call.1} parent=1 // pred_fallthru
      _
    // Predicated region
    $region6: #{tpu_custom_call.1} parent=1 // pred_check
      _
    $region7: #{tpu_custom_call.1} parent=1 // pred_check_branch
      %25 = sbr.rel (0) target = $region9
    $region8: #{tpu_custom_call.1} parent=1 // pred_region
      %s27 = ssub.s32 24576, 24576
      %28 = vsyncadd [#allocation6], %s27
      %s29 = sshll.u32 [#allocation5], 4
      %s30 = int_to_ptr.vmem [resolvable:$true] %s29
      %35 = dma.hbm_to_vmem [thread:$0]  %s1, 24576, %s30, [#allocation6], 256, 256, 16
    $region9: #{tpu_custom_call.1} parent=1 // pred_fallthru
      _
    // Predicated region
    $region10: #{tpu_custom_call.1} parent=1 // pred_check
      _
    $region11: #{tpu_custom_call.1} parent=1 // pred_check_branch
      %37 = sbr.rel (0) target = $region13
    $region12: #{tpu_custom_call.1} parent=1 // pred_region
      %s39 = ssub.s32 8192, 8192
      %40 = vsyncadd [#allocation6], %s39
      %s41 = sshll.u32 [#allocation7], 4
      %s42 = int_to_ptr.vmem [resolvable:$true] %s41
      %47 = dma.hbm_to_vmem [thread:$0]  %s2, 8192, %s42, [#allocation6], 256, 256, 16
    $region13: #{tpu_custom_call.1} parent=1 // pred_fallthru
      _
    // Predicated region
    $region14: #{tpu_custom_call.1} parent=1 // pred_check
      _
    $region15: #{tpu_custom_call.1} parent=1 // pred_check_branch
      %49 = sbr.rel (0) target = $region17
    $region16: #{tpu_custom_call.1} parent=1 // pred_region
      _
    $region17: #{tpu_custom_call.1} parent=1 // pred_fallthru
      _
    // Predicated region
    $region18: #{tpu_custom_call.1} parent=1 // pred_check
      _
    $region19: #{tpu_custom_call.1} parent=1 // pred_check_branch
      %51 = sbr.rel (0) target = $region21
    $region20: #{tpu_custom_call.1} parent=1 // pred_region
      %52 = dma.done [#allocation3], 6144
    $region21: #{tpu_custom_call.1} parent=1 // pred_fallthru
      _
    // Predicated region
    $region22: #{tpu_custom_call.1} parent=1 // pred_check
      _
    $region23: #{tpu_custom_call.1} parent=1 // pred_check_branch
      %54 = sbr.rel (0) target = $region25
    $region24: #{tpu_custom_call.1} parent=1 // pred_region
      %55 = dma.done [#allocation6], 24576
    $region25: #{tpu_custom_call.1} parent=1 // pred_fallthru
      _
    // Predicated region
    $region26: #{tpu_custom_call.1} parent=1 // pred_check
      _
    $region27: #{tpu_custom_call.1} parent=1 // pred_check_branch
      %57 = sbr.rel (0) target = $region29
    $region28: #{tpu_custom_call.1} parent=1 // pred_region
      %58 = dma.done [#allocation6], 8192
    $region29: #{tpu_custom_call.1} parent=1 // pred_fallthru
      _
    %v59 = vld [vmem:[#allocation5] sm:$0xff]
    %v60 = vld [vmem:[#allocation5 + $0x8] sm:$0xff]
    %v61 = vld [vmem:[#allocation5 + $0x10] sm:$0xff]
    %v62 = vld [vmem:[#allocation5 + $0x18] sm:$0xff]
    %v63 = vld [vmem:[#allocation5 + $0x20] sm:$0xff]
    %v64 = vld [vmem:[#allocation5 + $0x28] sm:$0xff]
    %v65 = vld [vmem:[#allocation5 + $0x30] sm:$0xff]
    %v66 = vld [vmem:[#allocation5 + $0x38] sm:$0xff]
    %v67 = vld [vmem:[#allocation5 + $0x40] sm:$0xff]
    %v68 = vld [vmem:[#allocation5 + $0x48] sm:$0xff]
    %v69 = vld [vmem:[#allocation5 + $0x50] sm:$0xff]
    %v70 = vld [vmem:[#allocation5 + $0x58] sm:$0xff]
    %v71 = vld [vmem:[#allocation5 + $0x60] sm:$0xff]
    %v72 = vld [vmem:[#allocation5 + $0x68] sm:$0xff]
    %v73 = vld [vmem:[#allocation5 + $0x70] sm:$0xff]
    %v74 = vld [vmem:[#allocation5 + $0x78] sm:$0xff]
    %v75 = vld [vmem:[#allocation5 + $0x80] sm:$0xff]
    %v76 = vld [vmem:[#allocation5 + $0x88] sm:$0xff]
    %v77 = vld [vmem:[#allocation5 + $0x90] sm:$0xff]
    %v78 = vld [vmem:[#allocation5 + $0x98] sm:$0xff]
    %v79 = vld [vmem:[#allocation5 + $0xa0] sm:$0xff]
    %v80 = vld [vmem:[#allocation5 + $0xa8] sm:$0xff]
    %v81 = vld [vmem:[#allocation5 + $0xb0] sm:$0xff]
    %v82 = vld [vmem:[#allocation5 + $0xb8] sm:$0xff]
    %v83 = vld [vmem:[#allocation5 + $0xc0] sm:$0xff]
    %v84 = vld [vmem:[#allocation5 + $0xc8] sm:$0xff]
    %v85 = vld [vmem:[#allocation5 + $0xd0] sm:$0xff]
    %v86 = vld [vmem:[#allocation5 + $0xd8] sm:$0xff]
    %v87 = vld [vmem:[#allocation5 + $0xe0] sm:$0xff]
    %v88 = vld [vmem:[#allocation5 + $0xe8] sm:$0xff]
    %v89 = vld [vmem:[#allocation5 + $0xf0] sm:$0xff]
    %v90 = vld [vmem:[#allocation5 + $0xf8] sm:$0xff]
    %v91 = vld [vmem:[#allocation5 + $0x100] sm:$0xff]
    %v92 = vld [vmem:[#allocation5 + $0x108] sm:$0xff]
    %v93 = vld [vmem:[#allocation5 + $0x110] sm:$0xff]
    %v94 = vld [vmem:[#allocation5 + $0x118] sm:$0xff]
    %v95 = vld [vmem:[#allocation5 + $0x120] sm:$0xff]
    %v96 = vld [vmem:[#allocation5 + $0x128] sm:$0xff]
    %v97 = vld [vmem:[#allocation5 + $0x130] sm:$0xff]
    %v98 = vld [vmem:[#allocation5 + $0x138] sm:$0xff]
    %v99 = vld [vmem:[#allocation5 + $0x140] sm:$0xff]
    %v100 = vld [vmem:[#allocation5 + $0x148] sm:$0xff]
    %v101 = vld [vmem:[#allocation5 + $0x150] sm:$0xff]
    %v102 = vld [vmem:[#allocation5 + $0x158] sm:$0xff]
    %v103 = vld [vmem:[#allocation5 + $0x160] sm:$0xff]
    %v104 = vld [vmem:[#allocation5 + $0x168] sm:$0xff]
    %v105 = vld [vmem:[#allocation5 + $0x170] sm:$0xff]
    %v106 = vld [vmem:[#allocation5 + $0x178] sm:$0xff]
    %v107 = vld [vmem:[#allocation5 + $0x180] sm:$0xff]
    %v108 = vld [vmem:[#allocation5 + $0x188] sm:$0xff]
    %v109 = vld [vmem:[#allocation5 + $0x190] sm:$0xff]
    %v110 = vld [vmem:[#allocation5 + $0x198] sm:$0xff]
    %v111 = vld [vmem:[#allocation5 + $0x1a0] sm:$0xff]
    %v112 = vld [vmem:[#allocation5 + $0x1a8] sm:$0xff]
    %v113 = vld [vmem:[#allocation5 + $0x1b0] sm:$0xff]
    %v114 = vld [vmem:[#allocation5 + $0x1b8] sm:$0xff]
    %v115 = vld [vmem:[#allocation5 + $0x1c0] sm:$0xff]
    %v116 = vld [vmem:[#allocation5 + $0x1c8] sm:$0xff]
    %v117 = vld [vmem:[#allocation5 + $0x1d0] sm:$0xff]
    %v118 = vld [vmem:[#allocation5 + $0x1d8] sm:$0xff]
    %v119 = vld [vmem:[#allocation5 + $0x1e0] sm:$0xff]
    %v120 = vld [vmem:[#allocation5 + $0x1e8] sm:$0xff]
    %v121 = vld [vmem:[#allocation5 + $0x1f0] sm:$0xff]
    %v122 = vld [vmem:[#allocation5 + $0x1f8] sm:$0xff]
    %v123 = vld [vmem:[#allocation5 + $0x200] sm:$0xff]
    %v124 = vld [vmem:[#allocation5 + $0x208] sm:$0xff]
    %v125 = vld [vmem:[#allocation5 + $0x210] sm:$0xff]
    %v126 = vld [vmem:[#allocation5 + $0x218] sm:$0xff]
    %v127 = vld [vmem:[#allocation5 + $0x220] sm:$0xff]
    %v128 = vld [vmem:[#allocation5 + $0x228] sm:$0xff]
    %v129 = vld [vmem:[#allocation5 + $0x230] sm:$0xff]
    %v130 = vld [vmem:[#allocation5 + $0x238] sm:$0xff]
    %v131 = vld [vmem:[#allocation5 + $0x240] sm:$0xff]
    %v132 = vld [vmem:[#allocation5 + $0x248] sm:$0xff]
    %v133 = vld [vmem:[#allocation5 + $0x250] sm:$0xff]
    %v134 = vld [vmem:[#allocation5 + $0x258] sm:$0xff]
    %v135 = vld [vmem:[#allocation5 + $0x260] sm:$0xff]
    %v136 = vld [vmem:[#allocation5 + $0x268] sm:$0xff]
    %v137 = vld [vmem:[#allocation5 + $0x270] sm:$0xff]
    %v138 = vld [vmem:[#allocation5 + $0x278] sm:$0xff]
    %v139 = vld [vmem:[#allocation5 + $0x280] sm:$0xff]
    %v140 = vld [vmem:[#allocation5 + $0x288] sm:$0xff]
    %v141 = vld [vmem:[#allocation5 + $0x290] sm:$0xff]
    %v142 = vld [vmem:[#allocation5 + $0x298] sm:$0xff]
    %v143 = vld [vmem:[#allocation5 + $0x2a0] sm:$0xff]
    %v144 = vld [vmem:[#allocation5 + $0x2a8] sm:$0xff]
    %v145 = vld [vmem:[#allocation5 + $0x2b0] sm:$0xff]
    %v146 = vld [vmem:[#allocation5 + $0x2b8] sm:$0xff]
    %v147 = vld [vmem:[#allocation5 + $0x2c0] sm:$0xff]
    %v148 = vld [vmem:[#allocation5 + $0x2c8] sm:$0xff]
    %v149 = vld [vmem:[#allocation5 + $0x2d0] sm:$0xff]
    %v150 = vld [vmem:[#allocation5 + $0x2d8] sm:$0xff]
    %v151 = vld [vmem:[#allocation5 + $0x2e0] sm:$0xff]
    %v152 = vld [vmem:[#allocation5 + $0x2e8] sm:$0xff]
    %v153 = vld [vmem:[#allocation5 + $0x2f0] sm:$0xff]
    %v154 = vld [vmem:[#allocation5 + $0x2f8] sm:$0xff]
    %v155 = vld [vmem:[#allocation5 + $0x300] sm:$0xff]
    %v156 = vld [vmem:[#allocation5 + $0x308] sm:$0xff]
    %v157 = vld [vmem:[#allocation5 + $0x310] sm:$0xff]
    %v158 = vld [vmem:[#allocation5 + $0x318] sm:$0xff]
    %v159 = vld [vmem:[#allocation5 + $0x320] sm:$0xff]
    %v160 = vld [vmem:[#allocation5 + $0x328] sm:$0xff]
    %v161 = vld [vmem:[#allocation5 + $0x330] sm:$0xff]
    %v162 = vld [vmem:[#allocation5 + $0x338] sm:$0xff]
    %v163 = vld [vmem:[#allocation5 + $0x340] sm:$0xff]
    %v164 = vld [vmem:[#allocation5 + $0x348] sm:$0xff]
    %v165 = vld [vmem:[#allocation5 + $0x350] sm:$0xff]
    %v166 = vld [vmem:[#allocation5 + $0x358] sm:$0xff]
    %v167 = vld [vmem:[#allocation5 + $0x360] sm:$0xff]
    %v168 = vld [vmem:[#allocation5 + $0x368] sm:$0xff]
    %v169 = vld [vmem:[#allocation5 + $0x370] sm:$0xff]
    %v170 = vld [vmem:[#allocation5 + $0x378] sm:$0xff]
    %v171 = vld [vmem:[#allocation5 + $0x380] sm:$0xff]
    %v172 = vld [vmem:[#allocation5 + $0x388] sm:$0xff]
    %v173 = vld [vmem:[#allocation5 + $0x390] sm:$0xff]
    %v174 = vld [vmem:[#allocation5 + $0x398] sm:$0xff]
    %v175 = vld [vmem:[#allocation5 + $0x3a0] sm:$0xff]
    %v176 = vld [vmem:[#allocation5 + $0x3a8] sm:$0xff]
    %v177 = vld [vmem:[#allocation5 + $0x3b0] sm:$0xff]
    %v178 = vld [vmem:[#allocation5 + $0x3b8] sm:$0xff]
    %v179 = vld [vmem:[#allocation5 + $0x3c0] sm:$0xff]
    %v180 = vld [vmem:[#allocation5 + $0x3c8] sm:$0xff]
    %v181 = vld [vmem:[#allocation5 + $0x3d0] sm:$0xff]
    %v182 = vld [vmem:[#allocation5 + $0x3d8] sm:$0xff]
    %v183 = vld [vmem:[#allocation5 + $0x3e0] sm:$0xff]
    %v184 = vld [vmem:[#allocation5 + $0x3e8] sm:$0xff]
    %v185 = vld [vmem:[#allocation5 + $0x3f0] sm:$0xff]
    %v186 = vld [vmem:[#allocation5 + $0x3f8] sm:$0xff]
    %v187 = vld [vmem:[#allocation5 + $0x400] sm:$0xff]
    %v188 = vld [vmem:[#allocation5 + $0x408] sm:$0xff]
    %v189 = vld [vmem:[#allocation5 + $0x410] sm:$0xff]
    %v190 = vld [vmem:[#allocation5 + $0x418] sm:$0xff]
    %v191 = vld [vmem:[#allocation5 + $0x420] sm:$0xff]
    %v192 = vld [vmem:[#allocation5 + $0x428] sm:$0xff]
    %v193 = vld [vmem:[#allocation5 + $0x430] sm:$0xff]
    %v194 = vld [vmem:[#allocation5 + $0x438] sm:$0xff]
    %v195 = vld [vmem:[#allocation5 + $0x440] sm:$0xff]
    %v196 = vld [vmem:[#allocation5 + $0x448] sm:$0xff]
    %v197 = vld [vmem:[#allocation5 + $0x450] sm:$0xff]
    %v198 = vld [vmem:[#allocation5 + $0x458] sm:$0xff]
    %v199 = vld [vmem:[#allocation5 + $0x460] sm:$0xff]
    %v200 = vld [vmem:[#allocation5 + $0x468] sm:$0xff]
    %v201 = vld [vmem:[#allocation5 + $0x470] sm:$0xff]
    %v202 = vld [vmem:[#allocation5 + $0x478] sm:$0xff]
    %v203 = vld [vmem:[#allocation5 + $0x480] sm:$0xff]
    %v204 = vld [vmem:[#allocation5 + $0x488] sm:$0xff]
    %v205 = vld [vmem:[#allocation5 + $0x490] sm:$0xff]
    %v206 = vld [vmem:[#allocation5 + $0x498] sm:$0xff]
    %v207 = vld [vmem:[#allocation5 + $0x4a0] sm:$0xff]
    %v208 = vld [vmem:[#allocation5 + $0x4a8] sm:$0xff]
    %v209 = vld [vmem:[#allocation5 + $0x4b0] sm:$0xff]
    %v210 = vld [vmem:[#allocation5 + $0x4b8] sm:$0xff]
    %v211 = vld [vmem:[#allocation5 + $0x4c0] sm:$0xff]
    %v212 = vld [vmem:[#allocation5 + $0x4c8] sm:$0xff]
    %v213 = vld [vmem:[#allocation5 + $0x4d0] sm:$0xff]
    %v214 = vld [vmem:[#allocation5 + $0x4d8] sm:$0xff]
    %v215 = vld [vmem:[#allocation5 + $0x4e0] sm:$0xff]
    %v216 = vld [vmem:[#allocation5 + $0x4e8] sm:$0xff]
    %v217 = vld [vmem:[#allocation5 + $0x4f0] sm:$0xff]
    %v218 = vld [vmem:[#allocation5 + $0x4f8] sm:$0xff]
    %v219 = vld [vmem:[#allocation5 + $0x500] sm:$0xff]
    %v220 = vld [vmem:[#allocation5 + $0x508] sm:$0xff]
    %v221 = vld [vmem:[#allocation5 + $0x510] sm:$0xff]
    %v222 = vld [vmem:[#allocation5 + $0x518] sm:$0xff]
    %v223 = vld [vmem:[#allocation5 + $0x520] sm:$0xff]
    %v224 = vld [vmem:[#allocation5 + $0x528] sm:$0xff]
    %v225 = vld [vmem:[#allocation5 + $0x530] sm:$0xff]
    %v226 = vld [vmem:[#allocation5 + $0x538] sm:$0xff]
    %v227 = vld [vmem:[#allocation5 + $0x540] sm:$0xff]
    %v228 = vld [vmem:[#allocation5 + $0x548] sm:$0xff]
    %v229 = vld [vmem:[#allocation5 + $0x550] sm:$0xff]
    %v230 = vld [vmem:[#allocation5 + $0x558] sm:$0xff]
    %v231 = vld [vmem:[#allocation5 + $0x560] sm:$0xff]
    %v232 = vld [vmem:[#allocation5 + $0x568] sm:$0xff]
    %v233 = vld [vmem:[#allocation5 + $0x570] sm:$0xff]
    %v234 = vld [vmem:[#allocation5 + $0x578] sm:$0xff]
    %v235 = vld [vmem:[#allocation5 + $0x580] sm:$0xff]
    %v236 = vld [vmem:[#allocation5 + $0x588] sm:$0xff]
    %v237 = vld [vmem:[#allocation5 + $0x590] sm:$0xff]
    %v238 = vld [vmem:[#allocation5 + $0x598] sm:$0xff]
    %v239 = vld [vmem:[#allocation5 + $0x5a0] sm:$0xff]
    %v240 = vld [vmem:[#allocation5 + $0x5a8] sm:$0xff]
    %v241 = vld [vmem:[#allocation5 + $0x5b0] sm:$0xff]
    %v242 = vld [vmem:[#allocation5 + $0x5b8] sm:$0xff]
    %v243 = vld [vmem:[#allocation5 + $0x5c0] sm:$0xff]
    %v244 = vld [vmem:[#allocation5 + $0x5c8] sm:$0xff]
    %v245 = vld [vmem:[#allocation5 + $0x5d0] sm:$0xff]
    %v246 = vld [vmem:[#allocation5 + $0x5d8] sm:$0xff]
    %v247 = vld [vmem:[#allocation5 + $0x5e0] sm:$0xff]
    %v248 = vld [vmem:[#allocation5 + $0x5e8] sm:$0xff]
    %v249 = vld [vmem:[#allocation5 + $0x5f0] sm:$0xff]
    %v250 = vld [vmem:[#allocation5 + $0x5f8] sm:$0xff]
    %v251 = vld [vmem:[#allocation7] sm:$0xff]
    %v252 = vld [vmem:[#allocation7 + $0x8] sm:$0xff]
    %v253 = vld [vmem:[#allocation7 + $0x10] sm:$0xff]
    %v254 = vld [vmem:[#allocation7 + $0x18] sm:$0xff]
    %v255 = vld [vmem:[#allocation7 + $0x20] sm:$0xff]
    %v256 = vld [vmem:[#allocation7 + $0x28] sm:$0xff]
    %v257 = vld [vmem:[#allocation7 + $0x30] sm:$0xff]
    %v258 = vld [vmem:[#allocation7 + $0x38] sm:$0xff]
    %v259 = vld [vmem:[#allocation7 + $0x40] sm:$0xff]
    %v260 = vld [vmem:[#allocation7 + $0x48] sm:$0xff]
    %v261 = vld [vmem:[#allocation7 + $0x50] sm:$0xff]
    %v262 = vld [vmem:[#allocation7 + $0x58] sm:$0xff]
    %v263 = vld [vmem:[#allocation7 + $0x60] sm:$0xff]
    %v264 = vld [vmem:[#allocation7 + $0x68] sm:$0xff]
    %v265 = vld [vmem:[#allocation7 + $0x70] sm:$0xff]
    %v266 = vld [vmem:[#allocation7 + $0x78] sm:$0xff]
    %v267 = vld [vmem:[#allocation7 + $0x80] sm:$0xff]
    %v268 = vld [vmem:[#allocation7 + $0x88] sm:$0xff]
    %v269 = vld [vmem:[#allocation7 + $0x90] sm:$0xff]
    %v270 = vld [vmem:[#allocation7 + $0x98] sm:$0xff]
    %v271 = vld [vmem:[#allocation7 + $0xa0] sm:$0xff]
    %v272 = vld [vmem:[#allocation7 + $0xa8] sm:$0xff]
    %v273 = vld [vmem:[#allocation7 + $0xb0] sm:$0xff]
    %v274 = vld [vmem:[#allocation7 + $0xb8] sm:$0xff]
    %v275 = vld [vmem:[#allocation7 + $0xc0] sm:$0xff]
    %v276 = vld [vmem:[#allocation7 + $0xc8] sm:$0xff]
    %v277 = vld [vmem:[#allocation7 + $0xd0] sm:$0xff]
    %v278 = vld [vmem:[#allocation7 + $0xd8] sm:$0xff]
    %v279 = vld [vmem:[#allocation7 + $0xe0] sm:$0xff]
    %v280 = vld [vmem:[#allocation7 + $0xe8] sm:$0xff]
    %v281 = vld [vmem:[#allocation7 + $0xf0] sm:$0xff]
    %v282 = vld [vmem:[#allocation7 + $0xf8] sm:$0xff]
    %v283 = vld [vmem:[#allocation7 + $0x100] sm:$0xff]
    %v284 = vld [vmem:[#allocation7 + $0x108] sm:$0xff]
    %v285 = vld [vmem:[#allocation7 + $0x110] sm:$0xff]
    %v286 = vld [vmem:[#allocation7 + $0x118] sm:$0xff]
    %v287 = vld [vmem:[#allocation7 + $0x120] sm:$0xff]
    %v288 = vld [vmem:[#allocation7 + $0x128] sm:$0xff]
    %v289 = vld [vmem:[#allocation7 + $0x130] sm:$0xff]
    %v290 = vld [vmem:[#allocation7 + $0x138] sm:$0xff]
    %v291 = vld [vmem:[#allocation7 + $0x140] sm:$0xff]
    %v292 = vld [vmem:[#allocation7 + $0x148] sm:$0xff]
    %v293 = vld [vmem:[#allocation7 + $0x150] sm:$0xff]
    %v294 = vld [vmem:[#allocation7 + $0x158] sm:$0xff]
    %v295 = vld [vmem:[#allocation7 + $0x160] sm:$0xff]
    %v296 = vld [vmem:[#allocation7 + $0x168] sm:$0xff]
    %v297 = vld [vmem:[#allocation7 + $0x170] sm:$0xff]
    %v298 = vld [vmem:[#allocation7 + $0x178] sm:$0xff]
    %v299 = vld [vmem:[#allocation7 + $0x180] sm:$0xff]
    %v300 = vld [vmem:[#allocation7 + $0x188] sm:$0xff]
    %v301 = vld [vmem:[#allocation7 + $0x190] sm:$0xff]
    %v302 = vld [vmem:[#allocation7 + $0x198] sm:$0xff]
    %v303 = vld [vmem:[#allocation7 + $0x1a0] sm:$0xff]
    %v304 = vld [vmem:[#allocation7 + $0x1a8] sm:$0xff]
    %v305 = vld [vmem:[#allocation7 + $0x1b0] sm:$0xff]
    %v306 = vld [vmem:[#allocation7 + $0x1b8] sm:$0xff]
    %v307 = vld [vmem:[#allocation7 + $0x1c0] sm:$0xff]
    %v308 = vld [vmem:[#allocation7 + $0x1c8] sm:$0xff]
    %v309 = vld [vmem:[#allocation7 + $0x1d0] sm:$0xff]
    %v310 = vld [vmem:[#allocation7 + $0x1d8] sm:$0xff]
    %v311 = vld [vmem:[#allocation7 + $0x1e0] sm:$0xff]
    %v312 = vld [vmem:[#allocation7 + $0x1e8] sm:$0xff]
    %v313 = vld [vmem:[#allocation7 + $0x1f0] sm:$0xff]
    %v314 = vld [vmem:[#allocation7 + $0x1f8] sm:$0xff]
    %v315 = vld [vmem:[#allocation2] sm:$0xff]
    %v316 = vld [vmem:[#allocation2 + $0x8] sm:$0xff]
    %v317 = vld [vmem:[#allocation2 + $0x10] sm:$0xff]
    %v318 = vld [vmem:[#allocation2 + $0x18] sm:$0xff]
    %v319 = vld [vmem:[#allocation2 + $0x20] sm:$0xff]
    %v320 = vld [vmem:[#allocation2 + $0x28] sm:$0xff]
    %v321 = vld [vmem:[#allocation2 + $0x30] sm:$0xff]
    %v322 = vld [vmem:[#allocation2 + $0x38] sm:$0xff]
    %v323 = vld [vmem:[#allocation2 + $0x40] sm:$0xff]
    %v324 = vld [vmem:[#allocation2 + $0x48] sm:$0xff]
    %v325 = vld [vmem:[#allocation2 + $0x50] sm:$0xff]
    %v326 = vld [vmem:[#allocation2 + $0x58] sm:$0xff]
    %v327 = vld [vmem:[#allocation2 + $0x60] sm:$0xff]
    %v328 = vld [vmem:[#allocation2 + $0x68] sm:$0xff]
    %v329 = vld [vmem:[#allocation2 + $0x70] sm:$0xff]
    %v330 = vld [vmem:[#allocation2 + $0x78] sm:$0xff]
    %v331 = vld [vmem:[#allocation2 + $0x80] sm:$0xff]
    %v332 = vld [vmem:[#allocation2 + $0x88] sm:$0xff]
    %v333 = vld [vmem:[#allocation2 + $0x90] sm:$0xff]
    %v334 = vld [vmem:[#allocation2 + $0x98] sm:$0xff]
    %v335 = vld [vmem:[#allocation2 + $0xa0] sm:$0xff]
    %v336 = vld [vmem:[#allocation2 + $0xa8] sm:$0xff]
    %v337 = vld [vmem:[#allocation2 + $0xb0] sm:$0xff]
    %v338 = vld [vmem:[#allocation2 + $0xb8] sm:$0xff]
    %v339 = vld [vmem:[#allocation2 + $0xc0] sm:$0xff]
    %v340 = vld [vmem:[#allocation2 + $0xc8] sm:$0xff]
    %v341 = vld [vmem:[#allocation2 + $0xd0] sm:$0xff]
    %v342 = vld [vmem:[#allocation2 + $0xd8] sm:$0xff]
    %v343 = vld [vmem:[#allocation2 + $0xe0] sm:$0xff]
    %v344 = vld [vmem:[#allocation2 + $0xe8] sm:$0xff]
    %v345 = vld [vmem:[#allocation2 + $0xf0] sm:$0xff]
    %v346 = vld [vmem:[#allocation2 + $0xf8] sm:$0xff]
    %v347 = vld [vmem:[#allocation2 + $0x100] sm:$0xff]
    %v348 = vld [vmem:[#allocation2 + $0x108] sm:$0xff]
    %v349 = vld [vmem:[#allocation2 + $0x110] sm:$0xff]
    %v350 = vld [vmem:[#allocation2 + $0x118] sm:$0xff]
    %v351 = vld [vmem:[#allocation2 + $0x120] sm:$0xff]
    %v352 = vld [vmem:[#allocation2 + $0x128] sm:$0xff]
    %v353 = vld [vmem:[#allocation2 + $0x130] sm:$0xff]
    %v354 = vld [vmem:[#allocation2 + $0x138] sm:$0xff]
    %v355 = vld [vmem:[#allocation2 + $0x140] sm:$0xff]
    %v356 = vld [vmem:[#allocation2 + $0x148] sm:$0xff]
    %v357 = vld [vmem:[#allocation2 + $0x150] sm:$0xff]
    %v358 = vld [vmem:[#allocation2 + $0x158] sm:$0xff]
    %v359 = vld [vmem:[#allocation2 + $0x160] sm:$0xff]
    %v360 = vld [vmem:[#allocation2 + $0x168] sm:$0xff]
    %v361 = vld [vmem:[#allocation2 + $0x170] sm:$0xff]
    %v362 = vld [vmem:[#allocation2 + $0x178] sm:$0xff]
    %v363 = vld [vmem:[%s3] sm:$0xff]
    %v365 = vlaneseq
    %v366 = vshrl.u32 %v365, 7
    %v367 = vsub.s32 0, %v366
    %v368 = vrot.slane %v363, %v367
    %v369 = vlaneseq
    %v370 = vshrl.u32 %v369, 7
    %v371 = vsub.s32 4, %v370
    %v372 = vrot.slane %v363, %v371
    %v375 = vlaneseq
    %v376 = vshrl.u32 %v375, 7
    %v377 = vsub.s32 0, %v376
    %v378 = vrot.slane %v368, %v377
    %v379 = vlaneseq
    %v380 = vshrl.u32 %v379, 7
    %v381 = vsub.s32 0, %v380
    %v382 = vrot.slane %v372, %v381
    %383 = vmatprep.subr.mxu0 %v60
    %384 = vmatpush1.msra.mxu0 %v59
    %385 = vmatprep.subr.mxu0 %v62
    %386 = vmatpush1.msra.mxu0 %v61
    %387 = vmatprep.subr.mxu0 %v64
    %388 = vmatpush1.msra.mxu0 %v63
    %389 = vmatprep.subr.mxu0 %v66
    %390 = vmatpush1.msra.mxu0 %v65
    %391 = vmatprep.subr.mxu0 %v68
    %392 = vmatpush1.msra.mxu0 %v67
    %393 = vmatprep.subr.mxu0 %v70
    %394 = vmatpush1.msra.mxu0 %v69
    %395 = vmatprep.subr.mxu0 %v72
    %396 = vmatpush1.msra.mxu0 %v71
    %397 = vmatprep.subr.mxu0 %v74
    %398 = vmatpush1.msra.mxu0 %v73
    %399 = vmatprep.subr.mxu0 %v76
    %400 = vmatpush1.msra.mxu0 %v75
    %401 = vmatprep.subr.mxu0 %v78
    %402 = vmatpush1.msra.mxu0 %v77
    %403 = vmatprep.subr.mxu0 %v80
    %404 = vmatpush1.msra.mxu0 %v79
    %405 = vmatprep.subr.mxu0 %v82
    %406 = vmatpush1.msra.mxu0 %v81
    %407 = vmatprep.subr.mxu0 %v84
    %408 = vmatpush1.msra.mxu0 %v83
    %409 = vmatprep.subr.mxu0 %v86
    %410 = vmatpush1.msra.mxu0 %v85
    %411 = vmatprep.subr.mxu0 %v88
    %412 = vmatpush1.msra.mxu0 %v87
    %413 = vmatprep.subr.mxu0 %v90
    %414 = vmatpush1.msra.mxu0 %v89
    %415 = vmatprep.subr.mxu0 %v92
    %416 = vmatpush1.msra.mxu0 %v91
    %417 = vmatprep.subr.mxu0 %v94
    %418 = vmatpush1.msra.mxu0 %v93
    %419 = vmatprep.subr.mxu0 %v96
    %420 = vmatpush1.msra.mxu0 %v95
    %421 = vmatprep.subr.mxu0 %v98
    %422 = vmatpush1.msra.mxu0 %v97
    %423 = vmatprep.subr.mxu0 %v100
    %424 = vmatpush1.msra.mxu0 %v99
    %425 = vmatprep.subr.mxu0 %v102
    %426 = vmatpush1.msra.mxu0 %v101
    %427 = vmatprep.subr.mxu0 %v104
    %428 = vmatpush1.msra.mxu0 %v103
    %429 = vmatprep.subr.mxu0 %v106
    %430 = vmatpush1.msra.mxu0 %v105
    %431 = vmatprep.subr.mxu0 %v108
    %432 = vmatpush1.msra.mxu0 %v107
    %433 = vmatprep.subr.mxu0 %v110
    %434 = vmatpush1.msra.mxu0 %v109
    %435 = vmatprep.subr.mxu0 %v112
    %436 = vmatpush1.msra.mxu0 %v111
    %437 = vmatprep.subr.mxu0 %v114
    %438 = vmatpush1.msra.mxu0 %v113
    %439 = vmatprep.subr.mxu0 %v116
    %440 = vmatpush1.msra.mxu0 %v115
    %441 = vmatprep.subr.mxu0 %v118
    %442 = vmatpush1.msra.mxu0 %v117
    %443 = vmatprep.subr.mxu0 %v120
    %444 = vmatpush1.msra.mxu0 %v119
    %445 = vmatprep.subr.mxu0 %v122
    %446 = vmatpush1.msra.mxu0 %v121
    %447 = vmatprep.mubr.f32.mxu0 %v316
    %448 = vmatmul.mubr.f32.gmra.mrb[0].mxu0 %v315
    %v449 = vpop.f32.mrb[0].mxu0
    %v450 = vadd.f32 %v378, %v449
    %v451 = vpop.f32.mrb[0].mxu0
    %v452 = vadd.f32 %v382, %v451
    %453 = vmatprep.mubr.f32.mxu0 %v322
    %454 = vmatmul.mubr.f32.gmra.mrb[0].mxu0 %v321
    %v455 = vpop.f32.mrb[0].mxu0
    %v456 = vadd.f32 %v378, %v455
    %v457 = vpop.f32.mrb[0].mxu0
    %v458 = vadd.f32 %v382, %v457
    %459 = vmatprep.mubr.f32.mxu0 %v328
    %460 = vmatmul.mubr.f32.gmra.mrb[0].mxu0 %v327
    %v461 = vpop.f32.mrb[0].mxu0
    %v462 = vadd.f32 %v378, %v461
    %v463 = vpop.f32.mrb[0].mxu0
    %v464 = vadd.f32 %v382, %v463
    %465 = vmatprep.mubr.f32.mxu0 %v334
    %466 = vmatmul.mubr.f32.gmra.mrb[0].mxu0 %v333
    %v467 = vpop.f32.mrb[0].mxu0
    %v468 = vadd.f32 %v378, %v467
    %v469 = vpop.f32.mrb[0].mxu0
    %v470 = vadd.f32 %v382, %v469
    %471 = vmatprep.mubr.f32.mxu0 %v340
    %472 = vmatmul.mubr.f32.gmra.mrb[0].mxu0 %v339
    %v473 = vpop.f32.mrb[0].mxu0
    %v474 = vadd.f32 %v378, %v473
    %v475 = vpop.f32.mrb[0].mxu0
    %v476 = vadd.f32 %v382, %v475
    %477 = vmatprep.mubr.f32.mxu0 %v346
    %478 = vmatmul.mubr.f32.gmra.mrb[0].mxu0 %v345
    %v479 = vpop.f32.mrb[0].mxu0
    %v480 = vadd.f32 %v378, %v479
    %v481 = vpop.f32.mrb[0].mxu0
    %v482 = vadd.f32 %v382, %v481
    %483 = vmatprep.mubr.f32.mxu0 %v352
    %484 = vmatmul.mubr.f32.gmra.mrb[0].mxu0 %v351
    %v485 = vpop.f32.mrb[0].mxu0
    %v486 = vadd.f32 %v378, %v485
    %v487 = vpop.f32.mrb[0].mxu0
    %v488 = vadd.f32 %v382, %v487
    %489 = vmatprep.mubr.f32.mxu0 %v358
    %490 = vmatmul.mubr.f32.gmra.mrb[0].mxu0 %v357
    %v491 = vpop.f32.mrb[0].mxu0
    %v492 = vadd.f32 %v378, %v491
    %v493 = vpop.f32.mrb[0].mxu0
    %v494 = vadd.f32 %v382, %v493
    %495 = vdwg.mxu0
    %496 = vmatprep.subr.mxu0 %v124
    %497 = vmatpush1.msra.mxu0 %v123
    %498 = vmatprep.subr.mxu0 %v126
    %499 = vmatpush1.msra.mxu0 %v125
    %500 = vmatprep.subr.mxu0 %v128
    %501 = vmatpush1.msra.mxu0 %v127
    %502 = vmatprep.subr.mxu0 %v130
    %503 = vmatpush1.msra.mxu0 %v129
    %504 = vmatprep.subr.mxu0 %v132
    %505 = vmatpush1.msra.mxu0 %v131
    %506 = vmatprep.subr.mxu0 %v134
    %507 = vmatpush1.msra.mxu0 %v133
    %508 = vmatprep.subr.mxu0 %v136
    %509 = vmatpush1.msra.mxu0 %v135
    %510 = vmatprep.subr.mxu0 %v138
    %511 = vmatpush1.msra.mxu0 %v137
    %512 = vmatprep.subr.mxu0 %v140
    %513 = vmatpush1.msra.mxu0 %v139
    %514 = vmatprep.subr.mxu0 %v142
    %515 = vmatpush1.msra.mxu0 %v141
    %516 = vmatprep.subr.mxu0 %v144
    %517 = vmatpush1.msra.mxu0 %v143
    %518 = vmatprep.subr.mxu0 %v146
    %519 = vmatpush1.msra.mxu0 %v145
    %520 = vmatprep.subr.mxu0 %v148
    %521 = vmatpush1.msra.mxu0 %v147
    %522 = vmatprep.subr.mxu0 %v150
    %523 = vmatpush1.msra.mxu0 %v149
    %524 = vmatprep.subr.mxu0 %v152
    %525 = vmatpush1.msra.mxu0 %v151
    %526 = vmatprep.subr.mxu0 %v154
    %527 = vmatpush1.msra.mxu0 %v153
    %528 = vmatprep.subr.mxu0 %v156
    %529 = vmatpush1.msra.mxu0 %v155
    %530 = vmatprep.subr.mxu0 %v158
    %531 = vmatpush1.msra.mxu0 %v157
    %532 = vmatprep.subr.mxu0 %v160
    %533 = vmatpush1.msra.mxu0 %v159
    %534 = vmatprep.subr.mxu0 %v162
    %535 = vmatpush1.msra.mxu0 %v161
    %536 = vmatprep.subr.mxu0 %v164
    %537 = vmatpush1.msra.mxu0 %v163
    %538 = vmatprep.subr.mxu0 %v166
    %539 = vmatpush1.msra.mxu0 %v165
    %540 = vmatprep.subr.mxu0 %v168
    %541 = vmatpush1.msra.mxu0 %v167
    %542 = vmatprep.subr.mxu0 %v170
    %543 = vmatpush1.msra.mxu0 %v169
    %544 = vmatprep.subr.mxu0 %v172
    %545 = vmatpush1.msra.mxu0 %v171
    %546 = vmatprep.subr.mxu0 %v174
    %547 = vmatpush1.msra.mxu0 %v173
    %548 = vmatprep.subr.mxu0 %v176
    %549 = vmatpush1.msra.mxu0 %v175
    %550 = vmatprep.subr.mxu0 %v178
    %551 = vmatpush1.msra.mxu0 %v177
    %552 = vmatprep.subr.mxu0 %v180
    %553 = vmatpush1.msra.mxu0 %v179
    %554 = vmatprep.subr.mxu0 %v182
    %555 = vmatpush1.msra.mxu0 %v181
    %556 = vmatprep.subr.mxu0 %v184
    %557 = vmatpush1.msra.mxu0 %v183
    %558 = vmatprep.subr.mxu0 %v186
    %559 = vmatpush1.msra.mxu0 %v185
    %560 = vmatprep.mubr.f32.mxu0 %v318
    %561 = vmatmul.mubr.f32.gmra.mrb[0].mxu0 %v317
    %v562 = vpop.f32.mrb[0].mxu0
    %v563 = vadd.f32 %v450, %v562
    %v564 = vpop.f32.mrb[0].mxu0
    %v565 = vadd.f32 %v452, %v564
    %566 = vmatprep.mubr.f32.mxu0 %v324
    %567 = vmatmul.mubr.f32.gmra.mrb[0].mxu0 %v323
    %v568 = vpop.f32.mrb[0].mxu0
    %v569 = vadd.f32 %v456, %v568
    %v570 = vpop.f32.mrb[0].mxu0
    %v571 = vadd.f32 %v458, %v570
    %572 = vmatprep.mubr.f32.mxu0 %v330
    %573 = vmatmul.mubr.f32.gmra.mrb[0].mxu0 %v329
    %v574 = vpop.f32.mrb[0].mxu0
    %v575 = vadd.f32 %v462, %v574
    %v576 = vpop.f32.mrb[0].mxu0
    %v577 = vadd.f32 %v464, %v576
    %578 = vmatprep.mubr.f32.mxu0 %v336
    %579 = vmatmul.mubr.f32.gmra.mrb[0].mxu0 %v335
    %v580 = vpop.f32.mrb[0].mxu0
    %v581 = vadd.f32 %v468, %v580
    %v582 = vpop.f32.mrb[0].mxu0
    %v583 = vadd.f32 %v470, %v582
    %584 = vmatprep.mubr.f32.mxu0 %v342
    %585 = vmatmul.mubr.f32.gmra.mrb[0].mxu0 %v341
    %v586 = vpop.f32.mrb[0].mxu0
    %v587 = vadd.f32 %v474, %v586
    %v588 = vpop.f32.mrb[0].mxu0
    %v589 = vadd.f32 %v476, %v588
    %590 = vmatprep.mubr.f32.mxu0 %v348
    %591 = vmatmul.mubr.f32.gmra.mrb[0].mxu0 %v347
    %v592 = vpop.f32.mrb[0].mxu0
    %v593 = vadd.f32 %v480, %v592
    %v594 = vpop.f32.mrb[0].mxu0
    %v595 = vadd.f32 %v482, %v594
    %596 = vmatprep.mubr.f32.mxu0 %v354
    %597 = vmatmul.mubr.f32.gmra.mrb[0].mxu0 %v353
    %v598 = vpop.f32.mrb[0].mxu0
    %v599 = vadd.f32 %v486, %v598
    %v600 = vpop.f32.mrb[0].mxu0
    %v601 = vadd.f32 %v488, %v600
    %602 = vmatprep.mubr.f32.mxu0 %v360
    %603 = vmatmul.mubr.f32.gmra.mrb[0].mxu0 %v359
    %v604 = vpop.f32.mrb[0].mxu0
    %v605 = vadd.f32 %v492, %v604
    %v606 = vpop.f32.mrb[0].mxu0
    %v607 = vadd.f32 %v494, %v606
    %608 = vdwg.mxu0
    %609 = vmatprep.subr.mxu0 %v188
    %610 = vmatpush1.msra.mxu0 %v187
    %611 = vmatprep.subr.mxu0 %v190
    %612 = vmatpush1.msra.mxu0 %v189
    %613 = vmatprep.subr.mxu0 %v192
    %614 = vmatpush1.msra.mxu0 %v191
    %615 = vmatprep.subr.mxu0 %v194
    %616 = vmatpush1.msra.mxu0 %v193
    %617 = vmatprep.subr.mxu0 %v196
    %618 = vmatpush1.msra.mxu0 %v195
    %619 = vmatprep.subr.mxu0 %v198
    %620 = vmatpush1.msra.mxu0 %v197
    %621 = vmatprep.subr.mxu0 %v200
    %622 = vmatpush1.msra.mxu0 %v199
    %623 = vmatprep.subr.mxu0 %v202
    %624 = vmatpush1.msra.mxu0 %v201
    %625 = vmatprep.subr.mxu0 %v204
    %626 = vmatpush1.msra.mxu0 %v203
    %627 = vmatprep.subr.mxu0 %v206
    %628 = vmatpush1.msra.mxu0 %v205
    %629 = vmatprep.subr.mxu0 %v208
    %630 = vmatpush1.msra.mxu0 %v207
    %631 = vmatprep.subr.mxu0 %v210
    %632 = vmatpush1.msra.mxu0 %v209
    %633 = vmatprep.subr.mxu0 %v212
    %634 = vmatpush1.msra.mxu0 %v211
    %635 = vmatprep.subr.mxu0 %v214
    %636 = vmatpush1.msra.mxu0 %v213
    %637 = vmatprep.subr.mxu0 %v216
    %638 = vmatpush1.msra.mxu0 %v215
    %639 = vmatprep.subr.mxu0 %v218
    %640 = vmatpush1.msra.mxu0 %v217
    %641 = vmatprep.subr.mxu0 %v220
    %642 = vmatpush1.msra.mxu0 %v219
    %643 = vmatprep.subr.mxu0 %v222
    %644 = vmatpush1.msra.mxu0 %v221
    %645 = vmatprep.subr.mxu0 %v224
    %646 = vmatpush1.msra.mxu0 %v223
    %647 = vmatprep.subr.mxu0 %v226
    %648 = vmatpush1.msra.mxu0 %v225
    %649 = vmatprep.subr.mxu0 %v228
    %650 = vmatpush1.msra.mxu0 %v227
    %651 = vmatprep.subr.mxu0 %v230
    %652 = vmatpush1.msra.mxu0 %v229
    %653 = vmatprep.subr.mxu0 %v232
    %654 = vmatpush1.msra.mxu0 %v231
    %655 = vmatprep.subr.mxu0 %v234
    %656 = vmatpush1.msra.mxu0 %v233
    %657 = vmatprep.subr.mxu0 %v236
    %658 = vmatpush1.msra.mxu0 %v235
    %659 = vmatprep.subr.mxu0 %v238
    %660 = vmatpush1.msra.mxu0 %v237
    %661 = vmatprep.subr.mxu0 %v240
    %662 = vmatpush1.msra.mxu0 %v239
    %663 = vmatprep.subr.mxu0 %v242
    %664 = vmatpush1.msra.mxu0 %v241
    %665 = vmatprep.subr.mxu0 %v244
    %666 = vmatpush1.msra.mxu0 %v243
    %667 = vmatprep.subr.mxu0 %v246
    %668 = vmatpush1.msra.mxu0 %v245
    %669 = vmatprep.subr.mxu0 %v248
    %670 = vmatpush1.msra.mxu0 %v247
    %671 = vmatprep.subr.mxu0 %v250
    %672 = vmatpush1.msra.mxu0 %v249
    %673 = vmatprep.mubr.f32.mxu0 %v320
    %674 = vmatmul.mubr.f32.gmra.mrb[0].mxu0 %v319
    %v675 = vpop.f32.mrb[0].mxu0
    %v676 = vadd.f32 %v563, %v675
    %v677 = vpop.f32.mrb[0].mxu0
    %v678 = vadd.f32 %v565, %v677
    %679 = vmatprep.mubr.f32.mxu0 %v326
    %680 = vmatmul.mubr.f32.gmra.mrb[0].mxu0 %v325
    %v681 = vpop.f32.mrb[0].mxu0
    %v682 = vadd.f32 %v569, %v681
    %v683 = vpop.f32.mrb[0].mxu0
    %v684 = vadd.f32 %v571, %v683
    %685 = vmatprep.mubr.f32.mxu0 %v332
    %686 = vmatmul.mubr.f32.gmra.mrb[0].mxu0 %v331
    %v687 = vpop.f32.mrb[0].mxu0
    %v688 = vadd.f32 %v575, %v687
    %v689 = vpop.f32.mrb[0].mxu0
    %v690 = vadd.f32 %v577, %v689
    %691 = vmatprep.mubr.f32.mxu0 %v338
    %692 = vmatmul.mubr.f32.gmra.mrb[0].mxu0 %v337
    %v693 = vpop.f32.mrb[0].mxu0
    %v694 = vadd.f32 %v581, %v693
    %v695 = vpop.f32.mrb[0].mxu0
    %v696 = vadd.f32 %v583, %v695
    %697 = vmatprep.mubr.f32.mxu0 %v344
    %698 = vmatmul.mubr.f32.gmra.mrb[0].mxu0 %v343
    %v699 = vpop.f32.mrb[0].mxu0
    %v700 = vadd.f32 %v587, %v699
    %v701 = vpop.f32.mrb[0].mxu0
    %v702 = vadd.f32 %v589, %v701
    %703 = vmatprep.mubr.f32.mxu0 %v350
    %704 = vmatmul.mubr.f32.gmra.mrb[0].mxu0 %v349
    %v705 = vpop.f32.mrb[0].mxu0
    %v706 = vadd.f32 %v593, %v705
    %v707 = vpop.f32.mrb[0].mxu0
    %v708 = vadd.f32 %v595, %v707
    %709 = vmatprep.mubr.f32.mxu0 %v356
    %710 = vmatmul.mubr.f32.gmra.mrb[0].mxu0 %v355
    %v711 = vpop.f32.mrb[0].mxu0
    %v712 = vadd.f32 %v599, %v711
    %v713 = vpop.f32.mrb[0].mxu0
    %v714 = vadd.f32 %v601, %v713
    %715 = vmatprep.mubr.f32.mxu0 %v362
    %716 = vmatmul.mubr.f32.gmra.mrb[0].mxu0 %v361
    %v717 = vpop.f32.mrb[0].mxu0
    %v718 = vadd.f32 %v605, %v717
    %v719 = vpop.f32.mrb[0].mxu0
    %v720 = vadd.f32 %v607, %v719
    %721 = vdwg.mxu0
    %v722 = vmul.f32 %v676, 0.5
    %v723 = vmul.f32 %v678, 0.5
    %v724 = vmul.f32 %v682, 0.5
    %v725 = vmul.f32 %v684, 0.5
    %v726 = vmul.f32 %v688, 0.5
    %v727 = vmul.f32 %v690, 0.5
    %v728 = vmul.f32 %v694, 0.5
    %v729 = vmul.f32 %v696, 0.5
    %v730 = vmul.f32 %v700, 0.5
    %v731 = vmul.f32 %v702, 0.5
    %v732 = vmul.f32 %v706, 0.5
    %v733 = vmul.f32 %v708, 0.5
    %v734 = vmul.f32 %v712, 0.5
    %v735 = vmul.f32 %v714, 0.5
    %v736 = vmul.f32 %v718, 0.5
    %v737 = vmul.f32 %v720, 0.5
    %v738 = vmul.f32 %v676, 0.70710677
    %v739 = vmul.f32 %v678, 0.70710677
    %v740 = vmul.f32 %v682, 0.70710677
    %v741 = vmul.f32 %v684, 0.70710677
    %v742 = vmul.f32 %v688, 0.70710677
    %v743 = vmul.f32 %v690, 0.70710677
    %v744 = vmul.f32 %v694, 0.70710677
    %v745 = vmul.f32 %v696, 0.70710677
    %v746 = vmul.f32 %v700, 0.70710677
    %v747 = vmul.f32 %v702, 0.70710677
    %v748 = vmul.f32 %v706, 0.70710677
    %v749 = vmul.f32 %v708, 0.70710677
    %v750 = vmul.f32 %v712, 0.70710677
    %v751 = vmul.f32 %v714, 0.70710677
    %v752 = vmul.f32 %v718, 0.70710677
    %v753 = vmul.f32 %v720, 0.70710677
    %v754 = verf.f32.pop %v738
    %v755 = verf.f32.pop %v739
    %v756 = verf.f32.pop %v740
    %v757 = verf.f32.pop %v741
    %v758 = verf.f32.pop %v742
    %v759 = verf.f32.pop %v743
    %v760 = verf.f32.pop %v744
    %v761 = verf.f32.pop %v745
    %v762 = verf.f32.pop %v746
    %v763 = verf.f32.pop %v747
    %v764 = verf.f32.pop %v748
    %v765 = verf.f32.pop %v749
    %v766 = verf.f32.pop %v750
    %v767 = verf.f32.pop %v751
    %v768 = verf.f32.pop %v752
    %v769 = verf.f32.pop %v753
    %v770 = vadd.f32 %v754, 1.0
    %v771 = vadd.f32 %v755, 1.0
    %v772 = vadd.f32 %v756, 1.0
    %v773 = vadd.f32 %v757, 1.0
    %v774 = vadd.f32 %v758, 1.0
    %v775 = vadd.f32 %v759, 1.0
    %v776 = vadd.f32 %v760, 1.0
    %v777 = vadd.f32 %v761, 1.0
    %v778 = vadd.f32 %v762, 1.0
    %v779 = vadd.f32 %v763, 1.0
    %v780 = vadd.f32 %v764, 1.0
    %v781 = vadd.f32 %v765, 1.0
    %v782 = vadd.f32 %v766, 1.0
    %v783 = vadd.f32 %v767, 1.0
    %v784 = vadd.f32 %v768, 1.0
    %v785 = vadd.f32 %v769, 1.0
    %v786 = vmul.f32 %v722, %v770
    %v787 = vmul.f32 %v723, %v771
    %v788 = vmul.f32 %v724, %v772
    %v789 = vmul.f32 %v725, %v773
    %v790 = vmul.f32 %v726, %v774
    %v791 = vmul.f32 %v727, %v775
    %v792 = vmul.f32 %v728, %v776
    %v793 = vmul.f32 %v729, %v777
    %v794 = vmul.f32 %v730, %v778
    %v795 = vmul.f32 %v731, %v779
    %v796 = vmul.f32 %v732, %v780
    %v797 = vmul.f32 %v733, %v781
    %v798 = vmul.f32 %v734, %v782
    %v799 = vmul.f32 %v735, %v783
    %v800 = vmul.f32 %v736, %v784
    %v801 = vmul.f32 %v737, %v785
    %v802 = vlaneseq
    %v803 = vshrl.u32 %v802, 7
    %v804 = vsub.s32 1, %v803
    %v805 = vrot.slane %v363, %v804
    %v806 = vlaneseq
    %v807 = vshrl.u32 %v806, 7
    %v808 = vsub.s32 5, %v807
    %v809 = vrot.slane %v363, %v808
    %v812 = vlaneseq
    %v813 = vshrl.u32 %v812, 7
    %v814 = vsub.s32 1, %v813
    %v815 = vrot.slane %v805, %v814
    %v816 = vlaneseq
    %v817 = vshrl.u32 %v816, 7
    %v818 = vsub.s32 1, %v817
    %v819 = vrot.slane %v809, %v818
    %v820 = vadd.f32 %v676, %v815
    %v821 = vadd.f32 %v678, %v819
    %v822 = vadd.f32 %v682, %v815
    %v823 = vadd.f32 %v684, %v819
    %v824 = vadd.f32 %v688, %v815
    %v825 = vadd.f32 %v690, %v819
    %v826 = vadd.f32 %v694, %v815
    %v827 = vadd.f32 %v696, %v819
    %v828 = vadd.f32 %v700, %v815
    %v829 = vadd.f32 %v702, %v819
    %v830 = vadd.f32 %v706, %v815
    %v831 = vadd.f32 %v708, %v819
    %v832 = vadd.f32 %v712, %v815
    %v833 = vadd.f32 %v714, %v819
    %v834 = vadd.f32 %v718, %v815
    %v835 = vadd.f32 %v720, %v819
    %836 = vmatprep.subr.mxu0 %v252
    %837 = vmatpush1.msra.mxu0 %v251
    %838 = vmatprep.subr.mxu0 %v254
    %839 = vmatpush1.msra.mxu0 %v253
    %840 = vmatprep.subr.mxu0 %v256
    %841 = vmatpush1.msra.mxu0 %v255
    %842 = vmatprep.subr.mxu0 %v258
    %843 = vmatpush1.msra.mxu0 %v257
    %844 = vmatprep.subr.mxu0 %v260
    %845 = vmatpush1.msra.mxu0 %v259
    %846 = vmatprep.subr.mxu0 %v262
    %847 = vmatpush1.msra.mxu0 %v261
    %848 = vmatprep.subr.mxu0 %v264
    %849 = vmatpush1.msra.mxu0 %v263
    %850 = vmatprep.subr.mxu0 %v266
    %851 = vmatpush1.msra.mxu0 %v265
    %852 = vmatprep.subr.mxu0 %v268
    %853 = vmatpush1.msra.mxu0 %v267
    %854 = vmatprep.subr.mxu0 %v270
    %855 = vmatpush1.msra.mxu0 %v269
    %856 = vmatprep.subr.mxu0 %v272
    %857 = vmatpush1.msra.mxu0 %v271
    %858 = vmatprep.subr.mxu0 %v274
    %859 = vmatpush1.msra.mxu0 %v273
    %860 = vmatprep.subr.mxu0 %v276
    %861 = vmatpush1.msra.mxu0 %v275
    %862 = vmatprep.subr.mxu0 %v278
    %863 = vmatpush1.msra.mxu0 %v277
    %864 = vmatprep.subr.mxu0 %v280
    %865 = vmatpush1.msra.mxu0 %v279
    %866 = vmatprep.subr.mxu0 %v282
    %867 = vmatpush1.msra.mxu0 %v281
    %868 = vmatprep.subr.mxu0 %v284
    %869 = vmatpush1.msra.mxu0 %v283
    %870 = vmatprep.subr.mxu0 %v286
    %871 = vmatpush1.msra.mxu0 %v285
    %872 = vmatprep.subr.mxu0 %v288
    %873 = vmatpush1.msra.mxu0 %v287
    %874 = vmatprep.subr.mxu0 %v290
    %875 = vmatpush1.msra.mxu0 %v289
    %876 = vmatprep.subr.mxu0 %v292
    %877 = vmatpush1.msra.mxu0 %v291
    %878 = vmatprep.subr.mxu0 %v294
    %879 = vmatpush1.msra.mxu0 %v293
    %880 = vmatprep.subr.mxu0 %v296
    %881 = vmatpush1.msra.mxu0 %v295
    %882 = vmatprep.subr.mxu0 %v298
    %883 = vmatpush1.msra.mxu0 %v297
    %884 = vmatprep.subr.mxu0 %v300
    %885 = vmatpush1.msra.mxu0 %v299
    %886 = vmatprep.subr.mxu0 %v302
    %887 = vmatpush1.msra.mxu0 %v301
    %888 = vmatprep.subr.mxu0 %v304
    %889 = vmatpush1.msra.mxu0 %v303
    %890 = vmatprep.subr.mxu0 %v306
    %891 = vmatpush1.msra.mxu0 %v305
    %892 = vmatprep.subr.mxu0 %v308
    %893 = vmatpush1.msra.mxu0 %v307
    %894 = vmatprep.subr.mxu0 %v310
    %895 = vmatpush1.msra.mxu0 %v309
    %896 = vmatprep.subr.mxu0 %v312
    %897 = vmatpush1.msra.mxu0 %v311
    %898 = vmatprep.subr.mxu0 %v314
    %899 = vmatpush1.msra.mxu0 %v313
    %900 = vmatprep.mubr.f32.mxu0 %v787
    %901 = vmatmul.mubr.f32.gmra.mrb[0].mxu0 %v786
    %v902 = vpop.f32.mrb[0].mxu0
    %v903 = vadd.f32 %v820, %v902
    %v904 = vpop.f32.mrb[0].mxu0
    %v905 = vadd.f32 %v821, %v904
    %906 = vmatprep.mubr.f32.mxu0 %v789
    %907 = vmatmul.mubr.f32.gmra.mrb[0].mxu0 %v788
    %v908 = vpop.f32.mrb[0].mxu0
    %v909 = vadd.f32 %v822, %v908
    %v910 = vpop.f32.mrb[0].mxu0
    %v911 = vadd.f32 %v823, %v910
    %912 = vmatprep.mubr.f32.mxu0 %v791
    %913 = vmatmul.mubr.f32.gmra.mrb[0].mxu0 %v790
    %v914 = vpop.f32.mrb[0].mxu0
    %v915 = vadd.f32 %v824, %v914
    %v916 = vpop.f32.mrb[0].mxu0
    %v917 = vadd.f32 %v825, %v916
    %918 = vmatprep.mubr.f32.mxu0 %v793
    %919 = vmatmul.mubr.f32.gmra.mrb[0].mxu0 %v792
    %v920 = vpop.f32.mrb[0].mxu0
    %v921 = vadd.f32 %v826, %v920
    %v922 = vpop.f32.mrb[0].mxu0
    %v923 = vadd.f32 %v827, %v922
    %924 = vmatprep.mubr.f32.mxu0 %v795
    %925 = vmatmul.mubr.f32.gmra.mrb[0].mxu0 %v794
    %v926 = vpop.f32.mrb[0].mxu0
    %v927 = vadd.f32 %v828, %v926
    %v928 = vpop.f32.mrb[0].mxu0
    %v929 = vadd.f32 %v829, %v928
    %930 = vmatprep.mubr.f32.mxu0 %v797
    %931 = vmatmul.mubr.f32.gmra.mrb[0].mxu0 %v796
    %v932 = vpop.f32.mrb[0].mxu0
    %v933 = vadd.f32 %v830, %v932
    %v934 = vpop.f32.mrb[0].mxu0
    %v935 = vadd.f32 %v831, %v934
    %936 = vmatprep.mubr.f32.mxu0 %v799
    %937 = vmatmul.mubr.f32.gmra.mrb[0].mxu0 %v798
    %v938 = vpop.f32.mrb[0].mxu0
    %v939 = vadd.f32 %v832, %v938
    %v940 = vpop.f32.mrb[0].mxu0
    %v941 = vadd.f32 %v833, %v940
    %942 = vmatprep.mubr.f32.mxu0 %v801
    %943 = vmatmul.mubr.f32.gmra.mrb[0].mxu0 %v800
    %v944 = vpop.f32.mrb[0].mxu0
    %v945 = vadd.f32 %v834, %v944
    %v946 = vpop.f32.mrb[0].mxu0
    %v947 = vadd.f32 %v835, %v946
    %948 = vdwg.mxu0
    %v949 = vadd.f32 %v903, %v905
    %950 = vadd.xlane.f32.xlu0 %v949
    %v951 = vpop.xlane.xlu0 %950
    %v952 = vadd.f32 %v909, %v911
    %953 = vadd.xlane.f32.xlu0 %v952
    %v954 = vpop.xlane.xlu0 %953
    %v955 = vadd.f32 %v915, %v917
    %956 = vadd.xlane.f32.xlu0 %v955
    %v957 = vpop.xlane.xlu0 %956
    %v958 = vadd.f32 %v921, %v923
    %959 = vadd.xlane.f32.xlu0 %v958
    %v960 = vpop.xlane.xlu0 %959
    %v961 = vadd.f32 %v927, %v929
    %962 = vadd.xlane.f32.xlu0 %v961
    %v963 = vpop.xlane.xlu0 %962
    %v964 = vadd.f32 %v933, %v935
    %965 = vadd.xlane.f32.xlu0 %v964
    %v966 = vpop.xlane.xlu0 %965
    %v967 = vadd.f32 %v939, %v941
    %968 = vadd.xlane.f32.xlu0 %v967
    %v969 = vpop.xlane.xlu0 %968
    %v970 = vadd.f32 %v945, %v947
    %971 = vadd.xlane.f32.xlu0 %v970
    %v972 = vpop.xlane.xlu0 %971
    %v973 = vrcp.pop 256.0
    %v974 = vmul.f32 %v951, %v973
    %v975 = vmul.f32 %v954, %v973
    %v976 = vmul.f32 %v957, %v973
    %v977 = vmul.f32 %v960, %v973
    %v978 = vmul.f32 %v963, %v973
    %v979 = vmul.f32 %v966, %v973
    %v980 = vmul.f32 %v969, %v973
    %v981 = vmul.f32 %v972, %v973
    %v982 = vsub.f32 %v903, %v974
    %v983 = vsub.f32 %v905, %v974
    %v984 = vsub.f32 %v909, %v975
    %v985 = vsub.f32 %v911, %v975
    %v986 = vsub.f32 %v915, %v976
    %v987 = vsub.f32 %v917, %v976
    %v988 = vsub.f32 %v921, %v977
    %v989 = vsub.f32 %v923, %v977
    %v990 = vsub.f32 %v927, %v978
    %v991 = vsub.f32 %v929, %v978
    %v992 = vsub.f32 %v933, %v979
    %v993 = vsub.f32 %v935, %v979
    %v994 = vsub.f32 %v939, %v980
    %v995 = vsub.f32 %v941, %v980
    %v996 = vsub.f32 %v945, %v981
    %v997 = vsub.f32 %v947, %v981
    %v998 = vmul.f32 %v982, %v982
    %v999 = vmul.f32 %v983, %v983
    %v1000 = vmul.f32 %v984, %v984
    %v1001 = vmul.f32 %v985, %v985
    %v1002 = vmul.f32 %v986, %v986
    %v1003 = vmul.f32 %v987, %v987
    %v1004 = vmul.f32 %v988, %v988
    %v1005 = vmul.f32 %v989, %v989
    %v1006 = vmul.f32 %v990, %v990
    %v1007 = vmul.f32 %v991, %v991
    %v1008 = vmul.f32 %v992, %v992
    %v1009 = vmul.f32 %v993, %v993
    %v1010 = vmul.f32 %v994, %v994
    %v1011 = vmul.f32 %v995, %v995
    %v1012 = vmul.f32 %v996, %v996
    %v1013 = vmul.f32 %v997, %v997
    %v1014 = vadd.f32 %v998, %v999
    %1015 = vadd.xlane.f32.xlu0 %v1014
    %v1016 = vpop.xlane.xlu0 %1015
    %v1017 = vadd.f32 %v1000, %v1001
    %1018 = vadd.xlane.f32.xlu0 %v1017
    %v1019 = vpop.xlane.xlu0 %1018
    %v1020 = vadd.f32 %v1002, %v1003
    %1021 = vadd.xlane.f32.xlu0 %v1020
    %v1022 = vpop.xlane.xlu0 %1021
    %v1023 = vadd.f32 %v1004, %v1005
    %1024 = vadd.xlane.f32.xlu0 %v1023
    %v1025 = vpop.xlane.xlu0 %1024
    %v1026 = vadd.f32 %v1006, %v1007
    %1027 = vadd.xlane.f32.xlu0 %v1026
    %v1028 = vpop.xlane.xlu0 %1027
    %v1029 = vadd.f32 %v1008, %v1009
    %1030 = vadd.xlane.f32.xlu0 %v1029
    %v1031 = vpop.xlane.xlu0 %1030
    %v1032 = vadd.f32 %v1010, %v1011
    %1033 = vadd.xlane.f32.xlu0 %v1032
    %v1034 = vpop.xlane.xlu0 %1033
    %v1035 = vadd.f32 %v1012, %v1013
    %1036 = vadd.xlane.f32.xlu0 %v1035
    %v1037 = vpop.xlane.xlu0 %1036
    %v1038 = vmul.f32 %v1016, %v973
    %v1039 = vmul.f32 %v1019, %v973
    %v1040 = vmul.f32 %v1022, %v973
    %v1041 = vmul.f32 %v1025, %v973
    %v1042 = vmul.f32 %v1028, %v973
    %v1043 = vmul.f32 %v1031, %v973
    %v1044 = vmul.f32 %v1034, %v973
    %v1045 = vmul.f32 %v1037, %v973
    %v1046 = vadd.f32 %v1038, 1e-05
    %v1047 = vadd.f32 %v1039, 1e-05
    %v1048 = vadd.f32 %v1040, 1e-05
    %v1049 = vadd.f32 %v1041, 1e-05
    %v1050 = vadd.f32 %v1042, 1e-05
    %v1051 = vadd.f32 %v1043, 1e-05
    %v1052 = vadd.f32 %v1044, 1e-05
    %v1053 = vadd.f32 %v1045, 1e-05
    %v1054 = vrsqrt.pop %v1046
    %v1055 = vrsqrt.pop %v1047
    %v1056 = vrsqrt.pop %v1048
    %v1057 = vrsqrt.pop %v1049
    %v1058 = vrsqrt.pop %v1050
    %v1059 = vrsqrt.pop %v1051
    %v1060 = vrsqrt.pop %v1052
    %v1061 = vrsqrt.pop %v1053
    %v1062 = vmul.f32 %v982, %v1054
    %v1063 = vmul.f32 %v983, %v1054
    %v1064 = vmul.f32 %v984, %v1055
    %v1065 = vmul.f32 %v985, %v1055
    %v1066 = vmul.f32 %v986, %v1056
    %v1067 = vmul.f32 %v987, %v1056
    %v1068 = vmul.f32 %v988, %v1057
    %v1069 = vmul.f32 %v989, %v1057
    %v1070 = vmul.f32 %v990, %v1058
    %v1071 = vmul.f32 %v991, %v1058
    %v1072 = vmul.f32 %v992, %v1059
    %v1073 = vmul.f32 %v993, %v1059
    %v1074 = vmul.f32 %v994, %v1060
    %v1075 = vmul.f32 %v995, %v1060
    %v1076 = vmul.f32 %v996, %v1061
    %v1077 = vmul.f32 %v997, %v1061
    %v1078 = vlaneseq
    %v1079 = vshrl.u32 %v1078, 7
    %v1080 = vsub.s32 2, %v1079
    %v1081 = vrot.slane %v363, %v1080
    %v1082 = vlaneseq
    %v1083 = vshrl.u32 %v1082, 7
    %v1084 = vsub.s32 6, %v1083
    %v1085 = vrot.slane %v363, %v1084
    %v1088 = vlaneseq
    %v1089 = vshrl.u32 %v1088, 7
    %v1090 = vsub.s32 2, %v1089
    %v1091 = vrot.slane %v1081, %v1090
    %v1092 = vlaneseq
    %v1093 = vshrl.u32 %v1092, 7
    %v1094 = vsub.s32 2, %v1093
    %v1095 = vrot.slane %v1085, %v1094
    %v1096 = vmul.f32 %v1062, %v1091
    %v1097 = vmul.f32 %v1063, %v1095
    %v1098 = vmul.f32 %v1064, %v1091
    %v1099 = vmul.f32 %v1065, %v1095
    %v1100 = vmul.f32 %v1066, %v1091
    %v1101 = vmul.f32 %v1067, %v1095
    %v1102 = vmul.f32 %v1068, %v1091
    %v1103 = vmul.f32 %v1069, %v1095
    %v1104 = vmul.f32 %v1070, %v1091
    %v1105 = vmul.f32 %v1071, %v1095
    %v1106 = vmul.f32 %v1072, %v1091
    %v1107 = vmul.f32 %v1073, %v1095
    %v1108 = vmul.f32 %v1074, %v1091
    %v1109 = vmul.f32 %v1075, %v1095
    %v1110 = vmul.f32 %v1076, %v1091
    %v1111 = vmul.f32 %v1077, %v1095
    %v1112 = vlaneseq
    %v1113 = vshrl.u32 %v1112, 7
    %v1114 = vsub.s32 3, %v1113
    %v1115 = vrot.slane %v363, %v1114
    %v1116 = vlaneseq
    %v1117 = vshrl.u32 %v1116, 7
    %v1118 = vsub.s32 7, %v1117
    %v1119 = vrot.slane %v363, %v1118
    %v1122 = vlaneseq
    %v1123 = vshrl.u32 %v1122, 7
    %v1124 = vsub.s32 3, %v1123
    %v1125 = vrot.slane %v1115, %v1124
    %v1126 = vlaneseq
    %v1127 = vshrl.u32 %v1126, 7
    %v1128 = vsub.s32 3, %v1127
    %v1129 = vrot.slane %v1119, %v1128
    %v1130 = vadd.f32 %v1096, %v1125
    %v1131 = vadd.f32 %v1097, %v1129
    %v1132 = vadd.f32 %v1098, %v1125
    %v1133 = vadd.f32 %v1099, %v1129
    %v1134 = vadd.f32 %v1100, %v1125
    %v1135 = vadd.f32 %v1101, %v1129
    %v1136 = vadd.f32 %v1102, %v1125
    %v1137 = vadd.f32 %v1103, %v1129
    %v1138 = vadd.f32 %v1104, %v1125
    %v1139 = vadd.f32 %v1105, %v1129
    %v1140 = vadd.f32 %v1106, %v1125
    %v1141 = vadd.f32 %v1107, %v1129
    %v1142 = vadd.f32 %v1108, %v1125
    %v1143 = vadd.f32 %v1109, %v1129
    %v1144 = vadd.f32 %v1110, %v1125
    %v1145 = vadd.f32 %v1111, %v1129
    %1146 = vst [vmem:[#allocation8] sm:$0xff] %v1130
    %1147 = vst [vmem:[#allocation8 + $0x8] sm:$0xff] %v1131
    %1148 = vst [vmem:[#allocation8 + $0x10] sm:$0xff] %v1132
    %1149 = vst [vmem:[#allocation8 + $0x18] sm:$0xff] %v1133
    %1150 = vst [vmem:[#allocation8 + $0x20] sm:$0xff] %v1134
    %1151 = vst [vmem:[#allocation8 + $0x28] sm:$0xff] %v1135
    %1152 = vst [vmem:[#allocation8 + $0x30] sm:$0xff] %v1136
    %1153 = vst [vmem:[#allocation8 + $0x38] sm:$0xff] %v1137
    %1154 = vst [vmem:[#allocation8 + $0x40] sm:$0xff] %v1138
    %1155 = vst [vmem:[#allocation8 + $0x48] sm:$0xff] %v1139
    %1156 = vst [vmem:[#allocation8 + $0x50] sm:$0xff] %v1140
    %1157 = vst [vmem:[#allocation8 + $0x58] sm:$0xff] %v1141
    %1158 = vst [vmem:[#allocation8 + $0x60] sm:$0xff] %v1142
    %1159 = vst [vmem:[#allocation8 + $0x68] sm:$0xff] %v1143
    %1160 = vst [vmem:[#allocation8 + $0x70] sm:$0xff] %v1144
    %1161 = vst [vmem:[#allocation8 + $0x78] sm:$0xff] %v1145
    // Predicated region
    $region30: #{tpu_custom_call.1} parent=1 // pred_check
      _
    $region31: #{tpu_custom_call.1} parent=1 // pred_check_branch
      %1163 = sbr.rel (0) target = $region33
    $region32: #{tpu_custom_call.1} parent=1 // pred_region
      %s1165 = ssub.s32 2048, 2048
      %1166 = vsyncadd [#allocation4], %s1165
      %s1167 = sshll.u32 [#allocation8], 4
      %s1168 = int_to_ptr.vmem [resolvable:$true] %s1167
      %1173 = dma.vmem_to_hbm [thread:$0]  %s1168, 2048, %s4, [#allocation4], 256, 256, 16
    $region33: #{tpu_custom_call.1} parent=1 // pred_fallthru
      _
    // Predicated region
    $region34: #{tpu_custom_call.1} parent=1 // pred_check
      _
    $region35: #{tpu_custom_call.1} parent=1 // pred_check_branch
      %1175 = sbr.rel (0) target = $region37
    $region36: #{tpu_custom_call.1} parent=1 // pred_region
      %1176 = dma.done [#allocation4], 2048
    $region37: #{tpu_custom_call.1} parent=1 // pred_fallthru
      _
    %1177 = vsyncpa [#allocation3], 1
    %1178 = vsyncpa [#allocation6], 1
    %1179 = vsyncpa [#allocation4], 1

</llo_original>
